<compile_context>
chip_gen: v7x
topology: tpu7x:2x2x1
jax: 0.10.0
libtpu: 0.0.40
codegen_flags: <defaults>
</compile_context>

<pallas_src>
import functools

import jax
import jax.numpy as jnp
from jax.experimental import pallas as pl
from jax.experimental.pallas import tpu as pltpu


def _round_up(n, m):
    return (n + m - 1) // m * m


def _row_granularity(dtype):
    # Sublane packing: f32 -> 8 rows, bf16 -> 16, int8 -> 32.
    return 32 // max(1, jnp.dtype(dtype).itemsize)


def _tpu_budget():
    """Returns (vmem_capacity_bytes, #TensorCores sharing the 'parallel' axis)."""
    vmem = 64 << 20        # conservative fallback (v7x per-TC VMEM)
    num_tc = None
    try:
        info = pltpu.get_tpu_info()
        vmem = int(getattr(info, "vmem_capacity_bytes", vmem) or vmem)
        for attr in ("num_tensorcores", "tensorcore_count", "num_cores",
                     "cores_per_chip"):
            v = getattr(info, attr, None)
            if isinstance(v, int) and v > 0:
                num_tc = v
                break
    except Exception:
        pass
    if num_tc is None:
        # Heuristic: 64 MiB/TC chips (v7x, megacore parts) have 2 TCs sharing
        # the 'parallel' grid axis; 128 MiB chips (v5e/v6e) have a single TC.
        num_tc = 2 if vmem <= (64 << 20) else 1
    return vmem, num_tc


# ----------------------------- Pallas kernels -----------------------------

def _binary_kernel(thr_ref, x_ref, o_ref):
    # thr_ref: (1, D) f32 threshold; x_ref: (TB, D) native dtype (widened in-vreg).
    o_ref[...] = (x_ref[...] > thr_ref[...]).astype(o_ref.dtype)


def _multilevel_kernel(thr_ref, x_ref, o_ref, *, num_thr):
    # thr_ref: (num_thr, D) per-dim thresholds, sorted ascending along axis 0.
    x = x_ref[...]
    q = (x > thr_ref[0:1, :]).astype(jnp.int32)
    for t in range(1, num_thr):                      # static unroll (num_thr <= 3)
        q = q + (x > thr_ref[t:t + 1, :]).astype(jnp.int32)
    o_ref[...] = q.astype(o_ref.dtype)


def _expand_dim_major_kernel(thr_ref, x_ref, o_ref, *, num_thr):
    # Module ordering: out[b, d*num_thr + k] = x[b,d] > sorted_thr[num_thr-1-k, d].
    # Interleave done at bf16 width (half the relayout cost of f32); the
    # bit_major kernel below avoids the relayout entirely.
    x = x_ref[...]
    tb, td = x.shape
    bits = [(x > thr_ref[num_thr - 1 - k:num_thr - k, :]).astype(jnp.bfloat16)
            for k in range(num_thr)]
    codes = jnp.stack(bits, axis=-1)                 # (TB, TD, num_thr)
    o_ref[...] = codes.reshape(tb, td * num_thr).astype(o_ref.dtype)


def _expand_bit_major_kernel(thr_ref, x_ref, o_ref, *, num_thr, td):
    # Permuted ordering: out[b, k*td + d]. num_thr contiguous lane-dense slab
    # stores; downstream consumer absorbs the column permutation (e.g. permute
    # the next layer's weight rows once, offline).
    x = x_ref[...]
    for k in range(num_thr):
        o_ref[:, k * td:(k + 1) * td] = (
            x > thr_ref[num_thr - 1 - k:num_thr - k, :]).astype(o_ref.dtype)


# ------------------------------ JAX wrapper -------------------------------

def prepare_thresholds(thresholds, quantization_levels, *, lane_pad=True):
    """Sort + lay out the (dim, num_thr) threshold buffer once (hoisted off the
    per-forward critical path). Returns float32 (num_thr, dim_padded) with the
    embedding dim on the lane axis (padded to a multiple of 128 with +inf so
    padded columns quantize to 0), sorted ascending along axis 0."""
    num_thr = quantization_levels - 1
    thr = jnp.asarray(thresholds, jnp.float32).reshape(-1, num_thr)   # (dim, num_thr)
    thr = jnp.sort(thr, axis=1).T                                     # (num_thr, dim)
    if lane_pad:
        dim = thr.shape[1]
        dim_p = _round_up(dim, 128)
        if dim_p != dim:
            thr = jnp.pad(thr, ((0, 0), (0, dim_p - dim)),
                          constant_values=jnp.inf)
    return thr


def _pick_tb(batch, vmem_row_bytes, row_align, buffer_budget, num_tc):
    """Batch tile: as large as the VMEM budget allows (amortizes ~0.35us/step),
    capped at 4096 rows; on multi-TC chips the step count is rounded to a
    multiple of the TC count so both cores get (roughly) equal work; single-TC
    chips get no forced splitting."""
    batch_a = _round_up(batch, row_align)
    tb = buffer_budget // max(vmem_row_bytes, 1)
    tb = max(row_align, (tb // row_align) * row_align)
    tb = min(tb, 4096, batch_a)
    if num_tc > 1 and batch_a > row_align:
        steps = -(-batch_a // tb)
        if steps % num_tc != 0:
            steps = _round_up(steps, num_tc)
            tb = _round_up(-(-batch_a // steps), row_align)
    return tb


def quantization_forward(x, thr_rows, *, quantization_levels=2,
                         expand_quantized_bits=False,
                         out_dtype=jnp.int8, expand_layout="dim_major"):
    """Forward pass of QuantizationLayer (value semantics; STE is grad-only).

    x            : (batch, dim) float32 or bfloat16 (streamed at native width).
    thr_rows     : output of prepare_thresholds -> (num_thresholds, dim_padded) f32.
    out_dtype    : int8 (default) is exact for the values 0..3 and quarters the
                   HBM write stream vs. the module's float32; bf16/f32 also ok.
    expand_layout: "dim_major" (module ordering) or "bit_major" (lane-dense slab
                   stores; consumer must absorb the column permutation).
    """
    x = jnp.asarray(x)
    if not jnp.issubdtype(x.dtype, jnp.floating):
        x = x.astype(jnp.float32)
    batch, dim = x.shape
    num_thr = quantization_levels - 1
    thr_rows = jnp.asarray(thr_rows, jnp.float32)
    assert thr_rows.shape[0] == num_thr, thr_rows.shape
    dim_p = thr_rows.shape[1]
    assert dim_p in (dim, _round_up(dim, 128)), (dim, dim_p)
    if dim_p != dim:
        # only when dim is not already lane-aligned; padded cols -> 0, sliced off
        x = jnp.pad(x, ((0, 0), (0, dim_p - dim)))

    expand = expand_quantized_bits and quantization_levels > 2
    out_dtype = jnp.dtype(out_dtype)
    out_cols = dim_p * num_thr if expand else dim_p

    # ---- generation-aware tiling budget ----
    in_row = dim_p * x.dtype.itemsize
    out_row = out_cols * out_dtype.itemsize
    # dim_major expand keeps a bf16 bits + stacked temporary the size of the tile
    temp_row = 2 * out_cols * 2 if (expand and expand_layout == "dim_major") else 0
    vmem_row = 2 * (in_row + out_row) + temp_row          # double-buffered in+out

    vmem_cap, num_tc = _tpu_budget()
    vmem_limit = int(vmem_cap * 3 // 4)                   # 96 MiB v5e/v6e, 48 MiB v7x
    thr_bytes = num_thr * dim_p * 4
    buffer_budget = max(vmem_limit - 2 * thr_bytes - (2 << 20), 1 << 20)

    row_align = max(_row_granularity(x.dtype), _row_granularity(out_dtype))
    tb = _pick_tb(batch, vmem_row, row_align, buffer_budget, num_tc)
    # No jnp.pad of the batch: ragged last block -> OOB reads padded, stores masked.
    grid = (pl.cdiv(batch, tb),)

    if quantization_levels == 2:
        kernel = _binary_kernel
    elif not expand:
        kernel = functools.partial(_multilevel_kernel, num_thr=num_thr)
    elif expand_layout == "bit_major":
        kernel = functools.partial(_expand_bit_major_kernel, num_thr=num_thr, td=dim_p)
    else:
        kernel = functools.partial(_expand_dim_major_kernel, num_thr=num_thr)

    cost = pl.CostEstimate(
        flops=int(2 * batch * dim_p * num_thr),
        transcendentals=0,
        bytes_accessed=int(batch * in_row + thr_bytes + batch * out_row))

    out = pl.pallas_call(
        kernel,
        out_shape=jax.ShapeDtypeStruct((batch, out_cols), out_dtype),
        grid=grid,
        in_specs=[
            # full-dim, grid-invariant threshold rows -> stay resident in VMEM
            # (Pallas skips the re-fetch since the block index never changes).
            pl.BlockSpec((num_thr, dim_p), lambda i: (0, 0)),
            pl.BlockSpec((tb, dim_p), lambda i: (i, 0)),
        ],
        out_specs=pl.BlockSpec((tb, out_cols), lambda i: (i, 0)),
        compiler_params=pltpu.CompilerParams(
            dimension_semantics=("parallel",),
            vmem_limit_bytes=vmem_limit),
        cost_estimate=cost,
    )(thr_rows, x)

    if dim_p != dim:
        if not expand:
            out = out[:, :dim]
        elif expand_layout == "bit_major":
            out = out.reshape(batch, num_thr, dim_p)[:, :, :dim].reshape(
                batch, num_thr * dim)
        else:
            out = out.reshape(batch, dim_p, num_thr)[:, :dim, :].reshape(
                batch, dim * num_thr)
    return out


def init_thresholds(sample_embeddings, quantization_levels):
    """Mimics QuantizationLayer.initialize_thresholds (glue, plain JAX)."""
    num_thr = quantization_levels - 1
    quantiles = jnp.linspace(0.0, 1.0, num_thr + 2)[1:-1]
    thr = jnp.quantile(jnp.asarray(sample_embeddings, jnp.float32),
                       quantiles, axis=0).T            # (dim, num_thr)
    return thr


# ------------------------------ reference ---------------------------------

def ref_forward(x, thresholds, quantization_levels=2, expand_quantized_bits=False):
    x = jnp.asarray(x, jnp.float32)
    if quantization_levels == 2:
        return (x > jnp.asarray(thresholds, jnp.float32).reshape(-1)[None, :]
                ).astype(jnp.float32)
    num_thr = quantization_levels - 1
    thr = jnp.sort(jnp.asarray(thresholds, jnp.float32), axis=1)     # (dim, num_thr)
    q = jnp.sum(x[:, :, None] > thr[None, :, :], axis=-1).astype(jnp.float32)
    if expand_quantized_bits:
        bits = jnp.stack(
            [(q >= (num_thr - k)).astype(jnp.float32) for k in range(num_thr)],
            axis=-1)
        return bits.reshape(x.shape[0], x.shape[1] * num_thr)
    return q


# --------------------------------- main ------------------------------------

if __name__ == "__main__":
    key = jax.random.PRNGKey(0)
    batch, dim = 8, 256
    x = jax.random.normal(key, (batch, dim), dtype=jnp.float32)

    ok = True

    # default config: binary quantization, default int8 output
    thr2 = init_thresholds(x, 2)                       # (dim, 1)
    rows2 = prepare_thresholds(thr2, 2)
    out2 = jax.block_until_ready(
        quantization_forward(x, rows2, quantization_levels=2))
    ok &= bool(jnp.array_equal(out2.astype(jnp.float32), ref_forward(x, thr2, 2)))
    ok &= out2.shape == (batch, dim)

    # 1.5-bit (3-level) quantization, float32 output (exact module dtype)
    thr3 = init_thresholds(x, 3)                       # (dim, 2)
    rows3 = prepare_thresholds(thr3, 3)
    out3 = jax.block_until_ready(
        quantization_forward(x, rows3, quantization_levels=3,
                             out_dtype=jnp.float32))
    ok &= bool(jnp.array_equal(out3, ref_forward(x, thr3, 3)))

    # 2-bit (4-level) with codebook expansion, module (dim-major) ordering, int8 out
    thr4 = init_thresholds(x, 4)                       # (dim, 3)
    rows4 = prepare_thresholds(thr4, 4)
    out4 = jax.block_until_ready(
        quantization_forward(x, rows4, quantization_levels=4,
                             expand_quantized_bits=True))
    ref4 = ref_forward(x, thr4, 4, True)
    ok &= bool(jnp.array_equal(out4.astype(jnp.float32), ref4))
    ok &= out4.shape == (batch, dim * 3)

    # bit-major expansion layout (lane-dense slab stores); values are a column
    # permutation of the module output that a downstream consumer absorbs.
    out4bm = jax.block_until_ready(
        quantization_forward(x, rows4, quantization_levels=4,
                             expand_quantized_bits=True,
                             expand_layout="bit_major"))
    ref4bm = ref4.reshape(batch, dim, 3).transpose(0, 2, 1).reshape(batch, dim * 3)
    ok &= bool(jnp.array_equal(out4bm.astype(jnp.float32), ref4bm))

    # bf16 input + bf16 output (no wrapper up-cast; values 0..3 exact in bf16)
    xb = x.astype(jnp.bfloat16)
    out4b = jax.block_until_ready(
        quantization_forward(xb, rows4, quantization_levels=4,
                             expand_quantized_bits=True,
                             out_dtype=jnp.bfloat16))
    ref4b = ref_forward(xb.astype(jnp.float32), thr4, 4, True)
    ok &= bool(jnp.array_equal(out4b.astype(jnp.float32), ref4b))

    # batch not a multiple of 8 -> ragged (masked) block, no jnp.pad copy
    x_odd = jax.random.normal(jax.random.PRNGKey(1), (5, dim), dtype=jnp.float32)
    out_odd = jax.block_until_ready(
        quantization_forward(x_odd, rows3, quantization_levels=3,
                             out_dtype=jnp.float32))
    ok &= bool(jnp.array_equal(out_odd, ref_forward(x_odd, thr3, 3)))

    # dim not a multiple of 128 -> lane padding in prepare_thresholds + column slice
    dim_np = 200
    x_np = jax.random.normal(jax.random.PRNGKey(2), (8, dim_np), dtype=jnp.float32)
    thr3n = init_thresholds(x_np, 3)
    rows3n = prepare_thresholds(thr3n, 3)              # padded to 256 lanes
    out_np = jax.block_until_ready(
        quantization_forward(x_np, rows3n, quantization_levels=3))
    ok &= bool(jnp.array_equal(out_np.astype(jnp.float32),
                               ref_forward(x_np, thr3n, 3)))
    ok &= out_np.shape == (8, dim_np)

    print("KERNEL_OK" if ok else "MISMATCH")
</pallas_src>

<mosaic_0001>
module attributes {stable_mosaic.version = 11 : i64} {
  func.func @_binary_kernel(%arg0: i32, %arg1: memref<1x256xf32, #tpu.memory_space<vmem>>, %arg2: memref<32x256xf32, #tpu.memory_space<vmem>>, %arg3: memref<32x256xi8, #tpu.memory_space<vmem>>) attributes {dimension_semantics = [#tpu.dimension_semantics<parallel>], iteration_bounds = array<i64: 1>, scalar_prefetch = 0 : i64, scratch_operands = 0 : i64, tpu.core_type = #tpu.core_type<tc>, window_params = [{pipeline_mode = #tpu.pipeline_mode<synchronous>, transform_indices = @transform_0, window_bounds = array<i64: 1, 256>}, {transform_indices = @transform_1, window_bounds = array<i64: 32, 256>}, {transform_indices = @transform_2, window_bounds = array<i64: 32, 256>}]} {
    %c0 = arith.constant 0 : index
    %c0_0 = arith.constant 0 : index
    %0 = vector.load %arg2[%c0, %c0_0] : memref<32x256xf32, #tpu.memory_space<vmem>>, vector<32x256xf32>
    %c0_1 = arith.constant 0 : index
    %c0_2 = arith.constant 0 : index
    %1 = vector.load %arg1[%c0_1, %c0_2] : memref<1x256xf32, #tpu.memory_space<vmem>>, vector<1x256xf32>
    %2 = vector.broadcast %1 : vector<1x256xf32> to vector<32x256xf32>
    %3 = arith.cmpf ogt, %0, %2 : vector<32x256xf32>
    %4 = arith.extui %3 : vector<32x256xi1> to vector<32x256xi8>
    %c0_3 = arith.constant 0 : index
    %c0_4 = arith.constant 0 : index
    %5 = vector.load %arg3[%c0_3, %c0_4] : memref<32x256xi8, #tpu.memory_space<vmem>>, vector<32x256xi8>
    tpu.vector_store %arg3[%c0_3, %c0_4], %4 {strides = array<i32>} : memref<32x256xi8, #tpu.memory_space<vmem>>, vector<32x256xi8>,
    return
  }
  func.func @transform_0(%arg0: i32) -> (i32, i32) {
    %c0_i32 = arith.constant 0 : i32
    %c0_i32_0 = arith.constant 0 : i32
    %c0_i32_1 = arith.constant 0 : i32
    return %c0_i32, %c0_i32_0 : i32, i32
  }
  func.func @transform_1(%arg0: i32) -> (i32, i32) {
    %c0_i32 = arith.constant 0 : i32
    %c0_i32_0 = arith.constant 0 : i32
    return %arg0, %c0_i32 : i32, i32
  }
  func.func @transform_2(%arg0: i32) -> (i32, i32) {
    %c0_i32 = arith.constant 0 : i32
    %c0_i32_0 = arith.constant 0 : i32
    return %arg0, %c0_i32 : i32, i32
  }
}

</mosaic_0001>

<llo_original>
// kernel: tpu_custom_call.1
$region0: #{tpu_custom_call.1}
  #allocation0 [shape = 'u32[]', space=smem, size = 0x4, offset = 0x4, fixed_abs, tag = 'smem constant byte address 0x4 - core index']
  #allocation1 [shape = 'u32[144,128]{1,0:T(1,128)}', space=vmem, size = 0x12000, scoped, tag = 'internal scratch']
  %s0 = inlined_call_operand.hbm [shape: f32[1,256], index: 0, kind: input, shape index: {}]
  %s1 = inlined_call_operand.hbm [shape: f32[8,256], index: 1, kind: input, shape index: {}]
  %s2 = inlined_call_operand.hbm [shape: s8[8,256], index: 2, kind: output, shape index: {}]
  %s3 = sld [smem:[#allocation0]]
  $region26: #{tpu_custom_call.1} parent=0
    _
  %s5 = ssub.s32 1, %s3
  %s6 = scalar_select 0, %s5, %s3
  $region1: #{tpu_custom_call.1} parent=0
    #allocation2 [shape = 'u8[1024]{0}', space=vmem, size = 0x400, scoped, tag = 'input window, operand 0, single buffered']
    #allocation3 [shape = 's32[1]{0}', space=sflag, size = 0x4, scoped, tag = 'scoped memory for tpu_custom_call.1']
    #allocation4 [shape = 's32[1]{0}', space=sflag, size = 0x4, scoped, tag = 'scoped memory for tpu_custom_call.1']
    #allocation5 [shape = 'u8[32768]{0}', space=vmem, size = 0x8000, scoped, tag = 'input window, operand 1, single buffered']
    #allocation6 [shape = 's32[1]{0}', space=sflag, size = 0x4, scoped, tag = 'scoped memory for tpu_custom_call.1']
    #allocation7 [shape = 'u8[8192]{0}', space=vmem, size = 0x2000, scoped, tag = 'output window, operand 0, single buffered']
    %7 = vsyncpa [#allocation3], 0
    %8 = vsyncpa [#allocation6], 0
    %9 = vsyncpa [#allocation4], 0
    // Predicated region
    $region2: #{tpu_custom_call.1} parent=1 // pred_check
      _
    $region3: #{tpu_custom_call.1} parent=1 // pred_check_branch
      %11 = sbr.rel (0) target = $region5
    $region4: #{tpu_custom_call.1} parent=1 // pred_region
      %s13 = ssub.s32 32, 32
      %14 = vsyncadd [#allocation3], %s13
      %s16 = sshll.u32 [#allocation2], 4
      %s17 = int_to_ptr.vmem [resolvable:$true] %s16
      %19 = dma.hbm_to_vmem [thread:$0]  %s0, 32, %s17, [#allocation3]
    $region5: #{tpu_custom_call.1} parent=1 // pred_fallthru
      _
    // Predicated region
    $region6: #{tpu_custom_call.1} parent=1 // pred_check
      _
    $region7: #{tpu_custom_call.1} parent=1 // pred_check_branch
      %21 = sbr.rel (0) target = $region9
    $region8: #{tpu_custom_call.1} parent=1 // pred_region
      %s23 = ssub.s32 1024, 256
      %24 = vsyncadd [#allocation6], %s23
      %s25 = sshll.u32 [#allocation5], 4
      %s26 = int_to_ptr.vmem [resolvable:$true] %s25
      %31 = dma.hbm_to_vmem [thread:$0]  %s1, 256, %s26, [#allocation6], 256, 256, 16
    $region9: #{tpu_custom_call.1} parent=1 // pred_fallthru
      _
    // Predicated region
    $region10: #{tpu_custom_call.1} parent=1 // pred_check
      _
    $region11: #{tpu_custom_call.1} parent=1 // pred_check_branch
      %33 = sbr.rel (0) target = $region13
    $region12: #{tpu_custom_call.1} parent=1 // pred_region
      %34 = dma.done [#allocation3], 32
    $region13: #{tpu_custom_call.1} parent=1 // pred_fallthru
      _
    // Predicated region
    $region14: #{tpu_custom_call.1} parent=1 // pred_check
      _
    $region15: #{tpu_custom_call.1} parent=1 // pred_check_branch
      %36 = sbr.rel (0) target = $region17
    $region16: #{tpu_custom_call.1} parent=1 // pred_region
      %37 = dma.done [#allocation6], 1024
    $region17: #{tpu_custom_call.1} parent=1 // pred_fallthru
      _
    %v40 = vld [vmem:[#allocation5] sm:$0xff]
    %v41 = vld [vmem:[#allocation5 + $0x8] sm:$0xff]
    %v42 = vld [vmem:[#allocation5 + $0x10] sm:$0xff]
    %v43 = vld [vmem:[#allocation5 + $0x18] sm:$0xff]
    %v44 = vld [vmem:[#allocation5 + $0x20] sm:$0xff]
    %v45 = vld [vmem:[#allocation5 + $0x28] sm:$0xff]
    %v46 = vld [vmem:[#allocation5 + $0x30] sm:$0xff]
    %v47 = vld [vmem:[#allocation5 + $0x38] sm:$0xff]
    %v48 = vld [vmem:[#allocation2] sm:$0x3]
    %v50 = vlaneseq
    %v51 = vshrl.u32 %v50, 7
    %v52 = vsub.s32 0, %v51
    %v53 = vrot.slane %v48, %v52
    %v54 = vlaneseq
    %v55 = vshrl.u32 %v54, 7
    %v56 = vsub.s32 1, %v55
    %v57 = vrot.slane %v48, %v56
    %vm60 = vcmp.gt.f32.partialorder %v40, %v53
    %vm61 = vcmp.gt.f32.partialorder %v41, %v57
    %vm62 = vcmp.gt.f32.partialorder %v42, %v53
    %vm63 = vcmp.gt.f32.partialorder %v43, %v57
    %vm64 = vcmp.gt.f32.partialorder %v44, %v53
    %vm65 = vcmp.gt.f32.partialorder %v45, %v57
    %vm66 = vcmp.gt.f32.partialorder %v46, %v53
    %vm67 = vcmp.gt.f32.partialorder %v47, %v57
    %vm68 = vmpackc.low %vm62, %vm60
    %vm69 = vmpackc.low %vm66, %vm64
    %vm70 = vmpackc.even %vm69, %vm68
    %vm71 = vmpackc.low %vm63, %vm61
    %vm72 = vmpackc.low %vm67, %vm65
    %vm73 = vmpackc.even %vm72, %vm71
    %v74 = vsel %vm70, 16843009, 0
    %v75 = vsel %vm73, 16843009, 0
    %v76 = vunpack.c.0.s8 %v74
    %v77 = vunpack.c.0.s8 %v75
    %v78 = vunpack.c.1.s8 %v74
    %v79 = vunpack.c.1.s8 %v75
    %v80 = vunpack.c.2.s8 %v74
    %v81 = vunpack.c.2.s8 %v75
    %v82 = vunpack.c.3.s8 %v74
    %v83 = vunpack.c.3.s8 %v75
    %v84 = vpack.c.b16 %v77, %v76
    %v85 = vpack.c.b8 %v84, %v84
    %v86 = vpack.c.b16 %v79, %v78
    %v87 = vpack.c.b8 %v86, %v86
    %v88 = vpack.c.b16 %v81, %v80
    %v89 = vpack.c.b8 %v88, %v88
    %v90 = vpack.c.b16 %v83, %v82
    %v91 = vpack.c.b8 %v90, %v90
    %92 = vst [vmem:[#allocation7] sm:$0xf] %v85
    %93 = vst [vmem:[#allocation7 + $0x4] sm:$0xf] %v87
    %94 = vst [vmem:[#allocation7 + $0x8] sm:$0xf] %v89
    %95 = vst [vmem:[#allocation7 + $0xc] sm:$0xf] %v91
    // Predicated region
    $region18: #{tpu_custom_call.1} parent=1 // pred_check
      _
    $region19: #{tpu_custom_call.1} parent=1 // pred_check_branch
      %97 = sbr.rel (0) target = $region21
    $region20: #{tpu_custom_call.1} parent=1 // pred_region
      %s99 = ssub.s32 256, 64
      %100 = vsyncadd [#allocation4], %s99
      %s101 = sshll.u32 [#allocation7], 4
      %s102 = int_to_ptr.vmem [resolvable:$true] %s101
      %107 = dma.vmem_to_hbm [thread:$0]  %s102, 64, %s2, [#allocation4], 64, 64, 4
    $region21: #{tpu_custom_call.1} parent=1 // pred_fallthru
      _
    // Predicated region
    $region22: #{tpu_custom_call.1} parent=1 // pred_check
      _
    $region23: #{tpu_custom_call.1} parent=1 // pred_check_branch
      %109 = sbr.rel (0) target = $region25
    $region24: #{tpu_custom_call.1} parent=1 // pred_region
      %110 = dma.done [#allocation4], 256
    $region25: #{tpu_custom_call.1} parent=1 // pred_fallthru
      _
    %111 = vsyncpa [#allocation3], 1
    %112 = vsyncpa [#allocation6], 1
    %113 = vsyncpa [#allocation4], 1

</llo_original>
